<compile_context>
chip_gen: v6e
topology: v6e:2x2x1
jax: 0.10.0
libtpu: 0.0.40
codegen_flags: <defaults>
</compile_context>

<pallas_src>
import functools

import jax
import jax.numpy as jnp
from jax.experimental import pallas as pl
from jax.experimental.pallas import tpu as pltpu

# Per-tile byte budget of the streamed x tile (see header note).
_TILE_BYTE_BUDGET = 3 * 1024 * 1024
# Cap on lane-tile width: bounds the trace-time unroll of the lane-partial fold
# (<= 128 chunks of 128 lanes); tiles are grown further via channel/batch blocking.
_MAX_LANE_TILE = 128 * 128
# Safe on v5e/v6e (128 MiB physical VMEM) and v7x (64 MiB physical, 32 MiB default).
_VMEM_LIMIT_BYTES = 32 * 1024 * 1024


def _stats_kernel(x_ref, g_ref, b_ref, ss_ref, sum_acc, sq_acc, *,
                  eps, n_rows, lane_chunks):
    """Pass 1: per-channel sum/sumsq (f32 lane-partials) -> packed (scale, shift)."""
    n = pl.program_id(1)   # batch-block index (reduction axis)
    l = pl.program_id(2)   # lane-tile index over H*W (reduction axis)

    @pl.when((n == 0) & (l == 0))
    def _():
        sum_acc[...] = jnp.zeros_like(sum_acc)
        sq_acc[...] = jnp.zeros_like(sq_acc)

    if lane_chunks > 0:
        # Lane-partial accumulation: pure VPU adds into (cb, 128) partials.  The
        # single cross-lane (XLU) reduce happens once per channel block in the
        # finalize branch, so the streaming loop stays HBM-bound (matters at
        # v7x's 3.2 TB/s; mild win on v6e).
        ps = sum_acc[...]
        pq = sq_acc[...]
        for j in range(lane_chunks):   # static unroll, lane-aligned slices
            c = x_ref[:, :, j * 128:(j + 1) * 128].astype(jnp.float32)  # (nb,cb,128)
            ps = ps + jnp.sum(c, axis=0)
            pq = pq + jnp.sum(c * c, axis=0)
        sum_acc[...] = ps
        sq_acc[...] = pq
    else:
        # Lane width not a multiple of 128 (full-HW fallback): reduce directly
        # into column 0 of the partials.
        x = x_ref[...].astype(jnp.float32)                    # (nb, cb, lt)
        xs = jnp.sum(x, axis=0)                               # (cb, lt)
        xq = jnp.sum(x * x, axis=0)
        sum_acc[:, 0:1] += jnp.sum(xs, axis=-1, keepdims=True)
        sq_acc[:, 0:1] += jnp.sum(xq, axis=-1, keepdims=True)

    @pl.when((n == pl.num_programs(1) - 1) & (l == pl.num_programs(2) - 1))
    def _():
        total = jnp.sum(sum_acc[...], axis=-1, keepdims=True)   # (cb, 1)
        totsq = jnp.sum(sq_acc[...], axis=-1, keepdims=True)
        r = jnp.float32(n_rows)
        mean = total / r
        # Unbiased variance (Bessel), clamped against tiny negative fp error.
        # NOTE: n_rows == 1 divides by zero -> NaN, matching torch.std().
        # NOTE: naive E[x^2]-E[x]^2 in f32; the 128-way lane partials mitigate the
        # accumulation error, but for extremely large N*H*W with |mean| >> std a
        # centered second pass would be numerically safer.
        var = jnp.maximum((totsq - r * mean * mean) / jnp.float32(n_rows - 1), 0.0)
        std = jnp.sqrt(var)
        scale = g_ref[...] / (std + jnp.float32(eps))            # (cb, 1)
        shift = b_ref[...] - mean * scale
        ss_ref[:, 0:1] = scale                                   # packed (cb, 2)
        ss_ref[:, 1:2] = shift


def _apply_kernel(x_ref, ss_ref, o_ref):
    """Pass 2: y = x * scale + shift, lane-dense over H*W, full 3-D block FMA."""
    x = x_ref[...].astype(jnp.float32)           # (nb, cb, lt)
    scale = ss_ref[:, 0:1][None, :, :]           # (1, cb, 1)
    shift = ss_ref[:, 1:2][None, :, :]
    o_ref[...] = (x * scale + shift).astype(o_ref.dtype)


def _sublane_quantum(dtype) -> int:
    # Native tiles: (8,128) f32, (16,128) bf16, (32,128) int8/fp8.
    return max(8, 32 // jnp.dtype(dtype).itemsize)


def _pick_channel_block(c: int, dtype) -> int:
    q = _sublane_quantum(dtype)
    if c % q != 0:
        return c                               # full-extent fallback
    max_cb = min(c, 256)
    if c >= 2 * q:
        # Keep >= 2 channel blocks so the only 'parallel' axis of pass 1 can be
        # split across both TensorCores on v7x megacore.
        max_cb = min(max_cb, c // 2)
    max_cb -= max_cb % q
    for cb in range(max_cb, q - 1, -q):
        if c % cb == 0:
            return cb
    return q


def _pick_lane_tile(hw: int, cb: int, itemsize: int) -> int:
    if hw % 128 != 0:
        return hw                              # full-extent fallback
    max_lt = min(hw, _MAX_LANE_TILE, _TILE_BYTE_BUDGET // (cb * itemsize))
    max_lt -= max_lt % 128
    max_lt = max(max_lt, 128)
    best = 128
    for lt in range(128, max_lt + 1, 128):
        if hw % lt == 0:
            best = lt
    return best


def _shrink_cb_for_budget(c: int, cb: int, lt: int, itemsize: int, dtype) -> int:
    # If the full-HW fallback made the (cb, lt) slab too big, trade channels down.
    if cb * lt * itemsize <= _TILE_BYTE_BUDGET:
        return cb
    q = _sublane_quantum(dtype)
    if c % q != 0:
        return cb
    best = q
    for cand in range(q, cb, q):
        if c % cand == 0 and cand * lt * itemsize <= _TILE_BYTE_BUDGET:
            best = cand
    return best


def _pick_batch_block(n: int, cb: int, lt: int, itemsize: int) -> int:
    per_batch = cb * lt * itemsize
    max_nb = max(1, _TILE_BYTE_BUDGET // per_batch)
    best = 1
    for nb in range(1, min(n, max_nb) + 1):
        if n % nb == 0:
            best = nb
    return best


def layer_norm_conv2d(x_nchw, gamma, beta, eps=1e-6):
    """x_nchw: (N, C, H, W); gamma, beta: (C,). Returns (N, C, H, W)."""
    N, C, H, W = x_nchw.shape
    HW = H * W
    R = N * HW                                   # reduction size per channel
    itemsize = jnp.dtype(x_nchw.dtype).itemsize

    x3 = x_nchw.reshape(N, C, HW)                # free reshape, no transpose
    g2 = gamma.reshape(C, 1).astype(jnp.float32)
    b2 = beta.reshape(C, 1).astype(jnp.float32)

    cb = _pick_channel_block(C, x_nchw.dtype)
    lt = _pick_lane_tile(HW, cb, itemsize)
    cb = _shrink_cb_for_budget(C, cb, lt, itemsize, x_nchw.dtype)
    nb = _pick_batch_block(N, cb, lt, itemsize)
    lane_chunks = lt // 128 if lt % 128 == 0 else 0

    grid = (C // cb, N // nb, HW // lt)

    x_spec = pl.BlockSpec((nb, cb, lt), lambda i, n, l: (n, i, l))
    cvec_spec = pl.BlockSpec((cb, 1), lambda i, n, l: (i, 0))
    ss_spec = pl.BlockSpec((cb, 2), lambda i, n, l: (i, 0))

    # Pass 1: per-channel fused affine packed as (C, 2) f32 = [scale, shift].
    scale_shift = pl.pallas_call(
        functools.partial(_stats_kernel, eps=eps, n_rows=R,
                          lane_chunks=lane_chunks),
        out_shape=jax.ShapeDtypeStruct((C, 2), jnp.float32),
        grid_spec=pltpu.PrefetchScalarGridSpec(
            num_scalar_prefetch=0,
            grid=grid,
            in_specs=[x_spec, cvec_spec, cvec_spec],
            out_specs=ss_spec,
            scratch_shapes=[pltpu.VMEM((cb, 128), jnp.float32),
                            pltpu.VMEM((cb, 128), jnp.float32)],
        ),
        compiler_params=pltpu.CompilerParams(
            dimension_semantics=("parallel", "arbitrary", "arbitrary"),
            vmem_limit_bytes=_VMEM_LIMIT_BYTES),
    )(x3, g2, b2)

    # Pass 2: streamed y = x * scale + shift (one multiply-add per element).
    y3 = pl.pallas_call(
        _apply_kernel,
        out_shape=jax.ShapeDtypeStruct((N, C, HW), x_nchw.dtype),
        grid_spec=pltpu.PrefetchScalarGridSpec(
            num_scalar_prefetch=0,
            grid=grid,
            in_specs=[x_spec, ss_spec],
            out_specs=x_spec,
        ),
        compiler_params=pltpu.CompilerParams(
            dimension_semantics=("parallel", "parallel", "parallel"),
            vmem_limit_bytes=_VMEM_LIMIT_BYTES),
    )(x3, scale_shift)

    return y3.reshape(N, C, H, W)


if __name__ == "__main__":
    key = jax.random.PRNGKey(0)
    N, C, H, W = 2, 4, 16, 16
    x = jax.random.normal(key, (N, C, H, W), dtype=jnp.float32)

    # Deterministic parameter init, as in the module's __init__:
    # gamma = ones(features), beta = zeros(features)
    gamma = jnp.ones((C,), dtype=jnp.float32)
    beta = jnp.zeros((C,), dtype=jnp.float32)
    eps = 1e-6

    out = layer_norm_conv2d(x, gamma, beta, eps)
    out = jax.block_until_ready(out)

    # Pure-JAX reference (same math as the PyTorch forward)
    x_flat = jnp.transpose(x, (0, 2, 3, 1)).reshape(-1, C)
    mean = x_flat.mean(axis=0)
    std = jnp.sqrt(jnp.sum((x_flat - mean) ** 2, axis=0) / (x_flat.shape[0] - 1))
    ref = (gamma[None, :, None, None] * (x - mean[None, :, None, None])
           / (std[None, :, None, None] + eps) + beta[None, :, None, None])
    assert jnp.allclose(out, ref, atol=1e-5, rtol=1e-5), "mismatch vs reference"

    print("KERNEL_OK")
</pallas_src>

<mosaic_0001>
module attributes {stable_mosaic.version = 11 : i64} {
  func.func @_stats_kernel(%arg0: i32, %arg1: i32, %arg2: i32, %arg3: memref<2x4x256xf32, #tpu.memory_space<vmem>>, %arg4: memref<4x1xf32, #tpu.memory_space<vmem>>, %arg5: memref<4x1xf32, #tpu.memory_space<vmem>>, %arg6: memref<4x2xf32, #tpu.memory_space<vmem>>, %arg7: memref<4x128xf32, #tpu.memory_space<vmem>>, %arg8: memref<4x128xf32, #tpu.memory_space<vmem>>) attributes {dimension_semantics = [#tpu.dimension_semantics<parallel>, #tpu.dimension_semantics<arbitrary>, #tpu.dimension_semantics<arbitrary>], iteration_bounds = array<i64: 1, 1, 1>, scalar_prefetch = 0 : i64, scratch_operands = 2 : i64, tpu.core_type = #tpu.core_type<tc>, window_params = [{transform_indices = @transform_0, window_bounds = array<i64: 2, 4, 256>}, {transform_indices = @transform_1, window_bounds = array<i64: 4, 1>}, {transform_indices = @transform_2, window_bounds = array<i64: 4, 1>}, {transform_indices = @transform_3, window_bounds = array<i64: 4, 2>}]} {
    %c0_i32 = arith.constant 0 : i32
    %0 = arith.cmpi eq, %arg1, %c0_i32 : i32
    %c0_i32_0 = arith.constant 0 : i32
    %1 = arith.cmpi eq, %arg2, %c0_i32_0 : i32
    %2 = arith.andi %0, %1 : i1
    %3 = arith.extui %2 : i1 to i32
    %c0_i32_1 = arith.constant 0 : i32
    %4 = arith.cmpi ne, %3, %c0_i32_1 : i32
    scf.if %4 {
      %cst_20 = arith.constant 0.000000e+00 : f32
      %26 = vector.broadcast %cst_20 : f32 to vector<4x128xf32>
      %c0_21 = arith.constant 0 : index
      %c0_22 = arith.constant 0 : index
      %27 = vector.load %arg7[%c0_21, %c0_22] : memref<4x128xf32, #tpu.memory_space<vmem>>, vector<4x128xf32>
      tpu.vector_store %arg7[%c0_21, %c0_22], %26 {strides = array<i32>} : memref<4x128xf32, #tpu.memory_space<vmem>>, vector<4x128xf32>,
      %cst_23 = arith.constant 0.000000e+00 : f32
      %28 = vector.broadcast %cst_23 : f32 to vector<4x128xf32>
      %c0_24 = arith.constant 0 : index
      %c0_25 = arith.constant 0 : index
      %29 = vector.load %arg8[%c0_24, %c0_25] : memref<4x128xf32, #tpu.memory_space<vmem>>, vector<4x128xf32>
      tpu.vector_store %arg8[%c0_24, %c0_25], %28 {strides = array<i32>} : memref<4x128xf32, #tpu.memory_space<vmem>>, vector<4x128xf32>,
    } else {
    }
    %c0 = arith.constant 0 : index
    %c0_2 = arith.constant 0 : index
    %5 = vector.load %arg7[%c0, %c0_2] : memref<4x128xf32, #tpu.memory_space<vmem>>, vector<4x128xf32>
    %c0_3 = arith.constant 0 : index
    %c0_4 = arith.constant 0 : index
    %6 = vector.load %arg8[%c0_3, %c0_4] : memref<4x128xf32, #tpu.memory_space<vmem>>, vector<4x128xf32>
    %c0_5 = arith.constant 0 : index
    %c0_6 = arith.constant 0 : index
    %c0_7 = arith.constant 0 : index
    %7 = vector.load %arg3[%c0_5, %c0_6, %c0_7] : memref<2x4x256xf32, #tpu.memory_space<vmem>>, vector<2x4x128xf32>
    %cst = arith.constant dense<0.000000e+00> : vector<4x128xf32>
    %8 = vector.multi_reduction <add>, %7, %cst [0] : vector<2x4x128xf32> to vector<4x128xf32>
    %9 = arith.addf %5, %8 : vector<4x128xf32>
    %10 = arith.mulf %7, %7 : vector<2x4x128xf32>
    %cst_8 = arith.constant dense<0.000000e+00> : vector<4x128xf32>
    %11 = vector.multi_reduction <add>, %10, %cst_8 [0] : vector<2x4x128xf32> to vector<4x128xf32>
    %12 = arith.addf %6, %11 : vector<4x128xf32>
    %c0_9 = arith.constant 0 : index
    %c0_10 = arith.constant 0 : index
    %c128 = arith.constant 128 : index
    %13 = vector.load %arg3[%c0_9, %c0_10, %c128] : memref<2x4x256xf32, #tpu.memory_space<vmem>>, vector<2x4x128xf32>
    %cst_11 = arith.constant dense<0.000000e+00> : vector<4x128xf32>
    %14 = vector.multi_reduction <add>, %13, %cst_11 [0] : vector<2x4x128xf32> to vector<4x128xf32>
    %15 = arith.addf %9, %14 : vector<4x128xf32>
    %16 = arith.mulf %13, %13 : vector<2x4x128xf32>
    %cst_12 = arith.constant dense<0.000000e+00> : vector<4x128xf32>
    %17 = vector.multi_reduction <add>, %16, %cst_12 [0] : vector<2x4x128xf32> to vector<4x128xf32>
    %18 = arith.addf %12, %17 : vector<4x128xf32>
    %c0_13 = arith.constant 0 : index
    %c0_14 = arith.constant 0 : index
    %19 = vector.load %arg7[%c0_13, %c0_14] : memref<4x128xf32, #tpu.memory_space<vmem>>, vector<4x128xf32>
    tpu.vector_store %arg7[%c0_13, %c0_14], %15 {strides = array<i32>} : memref<4x128xf32, #tpu.memory_space<vmem>>, vector<4x128xf32>,
    %c0_15 = arith.constant 0 : index
    %c0_16 = arith.constant 0 : index
    %20 = vector.load %arg8[%c0_15, %c0_16] : memref<4x128xf32, #tpu.memory_space<vmem>>, vector<4x128xf32>
    tpu.vector_store %arg8[%c0_15, %c0_16], %18 {strides = array<i32>} : memref<4x128xf32, #tpu.memory_space<vmem>>, vector<4x128xf32>,
    %c0_i32_17 = arith.constant 0 : i32
    %21 = arith.cmpi eq, %arg1, %c0_i32_17 : i32
    %c0_i32_18 = arith.constant 0 : i32
    %22 = arith.cmpi eq, %arg2, %c0_i32_18 : i32
    %23 = arith.andi %21, %22 : i1
    %24 = arith.extui %23 : i1 to i32
    %c0_i32_19 = arith.constant 0 : i32
    %25 = arith.cmpi ne, %24, %c0_i32_19 : i32
    scf.if %25 {
      %c0_20 = arith.constant 0 : index
      %c0_21 = arith.constant 0 : index
      %26 = vector.load %arg7[%c0_20, %c0_21] : memref<4x128xf32, #tpu.memory_space<vmem>>, vector<4x128xf32>
      %cst_22 = arith.constant dense<0.000000e+00> : vector<4xf32>
      %27 = vector.multi_reduction <add>, %26, %cst_22 [1] : vector<4x128xf32> to vector<4xf32>
      %28 = vector.shape_cast %27 : vector<4xf32> to vector<4x1xf32>
      %c0_23 = arith.constant 0 : index
      %c0_24 = arith.constant 0 : index
      %29 = vector.load %arg8[%c0_23, %c0_24] : memref<4x128xf32, #tpu.memory_space<vmem>>, vector<4x128xf32>
      %cst_25 = arith.constant dense<0.000000e+00> : vector<4xf32>
      %30 = vector.multi_reduction <add>, %29, %cst_25 [1] : vector<4x128xf32> to vector<4xf32>
      %31 = vector.shape_cast %30 : vector<4xf32> to vector<4x1xf32>
      %cst_26 = arith.constant 5.120000e+02 : f32
      %32 = vector.broadcast %cst_26 : f32 to vector<4x1xf32>
      %33 = arith.divf %28, %32 : vector<4x1xf32>
      %cst_27 = arith.constant 5.120000e+02 : f32
      %34 = vector.broadcast %cst_27 : f32 to vector<4x1xf32>
      %35 = arith.mulf %34, %33 : vector<4x1xf32>
      %36 = arith.mulf %35, %33 : vector<4x1xf32>
      %37 = arith.subf %31, %36 : vector<4x1xf32>
      %cst_28 = arith.constant 5.110000e+02 : f32
      %38 = vector.broadcast %cst_28 : f32 to vector<4x1xf32>
      %39 = arith.divf %37, %38 : vector<4x1xf32>
      %cst_29 = arith.constant 0.000000e+00 : f32
      %40 = vector.broadcast %cst_29 : f32 to vector<4x1xf32>
      %41 = arith.maximumf %39, %40 : vector<4x1xf32>
      %42 = math.sqrt %41 : vector<4x1xf32>
      %c0_30 = arith.constant 0 : index
      %c0_31 = arith.constant 0 : index
      %43 = vector.load %arg4[%c0_30, %c0_31] : memref<4x1xf32, #tpu.memory_space<vmem>>, vector<4x1xf32>
      %cst_32 = arith.constant 9.99999997E-7 : f32
      %44 = vector.broadcast %cst_32 : f32 to vector<4x1xf32>
      %45 = arith.addf %42, %44 : vector<4x1xf32>
      %46 = arith.divf %43, %45 : vector<4x1xf32>
      %c0_33 = arith.constant 0 : index
      %c0_34 = arith.constant 0 : index
      %47 = vector.load %arg5[%c0_33, %c0_34] : memref<4x1xf32, #tpu.memory_space<vmem>>, vector<4x1xf32>
      %48 = arith.mulf %33, %46 : vector<4x1xf32>
      %49 = arith.subf %47, %48 : vector<4x1xf32>
      %c0_35 = arith.constant 0 : index
      %c0_36 = arith.constant 0 : index
      %50 = vector.load %arg6[%c0_35, %c0_36] : memref<4x2xf32, #tpu.memory_space<vmem>>, vector<4x1xf32>
      tpu.vector_store %arg6[%c0_35, %c0_36], %46 {strides = array<i32>} : memref<4x2xf32, #tpu.memory_space<vmem>>, vector<4x1xf32>,
      %c0_37 = arith.constant 0 : index
      %c1 = arith.constant 1 : index
      %51 = vector.load %arg6[%c0_37, %c1] : memref<4x2xf32, #tpu.memory_space<vmem>>, vector<4x1xf32>
      tpu.vector_store %arg6[%c0_37, %c1], %49 {strides = array<i32>} : memref<4x2xf32, #tpu.memory_space<vmem>>, vector<4x1xf32>,
    } else {
    }
    return
  }
  func.func @transform_0(%arg0: i32, %arg1: i32, %arg2: i32) -> (i32, i32, i32) {
    %c0_i32 = arith.constant 0 : i32
    return %arg1, %arg0, %arg2 : i32, i32, i32
  }
  func.func @transform_1(%arg0: i32, %arg1: i32, %arg2: i32) -> (i32, i32) {
    %c0_i32 = arith.constant 0 : i32
    %c0_i32_0 = arith.constant 0 : i32
    return %arg0, %c0_i32 : i32, i32
  }
  func.func @transform_2(%arg0: i32, %arg1: i32, %arg2: i32) -> (i32, i32) {
    %c0_i32 = arith.constant 0 : i32
    %c0_i32_0 = arith.constant 0 : i32
    return %arg0, %c0_i32 : i32, i32
  }
  func.func @transform_3(%arg0: i32, %arg1: i32, %arg2: i32) -> (i32, i32) {
    %c0_i32 = arith.constant 0 : i32
    %c0_i32_0 = arith.constant 0 : i32
    return %arg0, %c0_i32 : i32, i32
  }
}

</mosaic_0001>

<llo_original>
// kernel: tpu_custom_call.1
$region0: #{tpu_custom_call.1}
  #allocation0 [shape = 'u32[]', space=smem, size = 0x4, offset = 0x4, fixed_abs, tag = 'smem constant byte address 0x4 - core index']
  #allocation1 [shape = 'u32[144,128]{1,0:T(1,128)}', space=vmem, size = 0x12000, scoped, tag = 'internal scratch']
  #allocation2 [shape = 'f32[4,128]{1,0:T(4,128)}', space=vmem, size = 0x800, scoped, tag = 'scratch operand']
  #allocation3 [shape = 'f32[4,128]{1,0:T(4,128)}', space=vmem, size = 0x800, scoped, tag = 'scratch operand']
  %s0 = inlined_call_operand.hbm [shape: f32[2,4,256], index: 0, kind: input, shape index: {}]
  %s1 = inlined_call_operand.vmem [shape: f32[4,1], index: 1, kind: input, shape index: {}]
  %s2 = inlined_call_operand.vmem [shape: f32[4,1], index: 2, kind: input, shape index: {}]
  %s3 = inlined_call_operand.vmem [shape: f32[4,2], index: 3, kind: output, shape index: {}]
  %s4 = sld [smem:[#allocation0]]
  $region34: #{tpu_custom_call.1} parent=0
    _
  %s6 = ssub.s32 1, %s4
  %s7 = scalar_select 0, %s6, %s4
  $region1: #{tpu_custom_call.1} parent=0
    #allocation4 [shape = 'u8[8192]{0}', space=vmem, size = 0x2000, scoped, tag = 'input window, operand 0, single buffered']
    #allocation5 [shape = 's32[1]{0}', space=sflag, size = 0x4, scoped, tag = 'scoped memory for tpu_custom_call.1']
    %8 = vsyncpa [#allocation5], 0
    // Predicated region
    $region2: #{tpu_custom_call.1} parent=1 // pred_check
      _
    $region3: #{tpu_custom_call.1} parent=1 // pred_check_branch
      %10 = sbr.rel (0) target = $region5
    $region4: #{tpu_custom_call.1} parent=1 // pred_region
      %s12 = ssub.s32 256, 256
      %13 = vsyncadd [#allocation5], %s12
      %s14 = sshll.u32 [#allocation4], 4
      %s15 = int_to_ptr.vmem [resolvable:$true] %s14
      %20 = dma.hbm_to_vmem [thread:$0]  %s0, 256, %s15, [#allocation5], 128, 128, 8
    $region5: #{tpu_custom_call.1} parent=1 // pred_fallthru
      _
    // Predicated region
    $region6: #{tpu_custom_call.1} parent=1 // pred_check
      _
    $region7: #{tpu_custom_call.1} parent=1 // pred_check_branch
      %22 = sbr.rel (0) target = $region9
    $region8: #{tpu_custom_call.1} parent=1 // pred_region
      _
    $region9: #{tpu_custom_call.1} parent=1 // pred_fallthru
      _
    // Predicated region
    $region10: #{tpu_custom_call.1} parent=1 // pred_check
      _
    $region11: #{tpu_custom_call.1} parent=1 // pred_check_branch
      %24 = sbr.rel (0) target = $region13
    $region12: #{tpu_custom_call.1} parent=1 // pred_region
      _
    $region13: #{tpu_custom_call.1} parent=1 // pred_fallthru
      _
    // Predicated region
    $region14: #{tpu_custom_call.1} parent=1 // pred_check
      _
    $region15: #{tpu_custom_call.1} parent=1 // pred_check_branch
      %26 = sbr.rel (0) target = $region17
    $region16: #{tpu_custom_call.1} parent=1 // pred_region
      %27 = dma.done [#allocation5], 256
    $region17: #{tpu_custom_call.1} parent=1 // pred_fallthru
      _
    %p28 = scmp.eq.s32.totalorder 0, 0
    %p29 = scmp.eq.s32.totalorder 0, 0
    %p30 = pnand %p28, %p29
    %p31 = pneg %p30
    // Predicated region
    $region18: #{tpu_custom_call.1} parent=1 // pred_check
      _
    $region19: #{tpu_custom_call.1} parent=1 // pred_check_branch
      %33 = sbr.rel (%p30) target = $region21
    $region20: #{tpu_custom_call.1} parent=1 // pred_region
      %34 = vst [vmem:[#allocation2] sm:$0xf] 0.0
      %35 = vst [vmem:[#allocation3] sm:$0xf] 0.0
    $region21: #{tpu_custom_call.1} parent=1 // pred_fallthru
      _
    %v36 = vld [vmem:[#allocation2] sm:$0xf]
    %v37 = vld [vmem:[#allocation3] sm:$0xf]
    %v38 = vld [vmem:[#allocation4] sm:$0xf]
    %v39 = vld [vmem:[#allocation4 + $0x8] sm:$0xf]
    %vm40 = vcmask 1043456
    %v41 = vsel %vm40, %v38, 0.0
    %v42 = vsel %vm40, %v39, 0.0
    %v43 = vadd.f32 %v41, %v42
    %v44 = vadd.f32 %v36, %v43
    %v45 = vmul.f32 %v38, %v38
    %v46 = vmul.f32 %v39, %v39
    %v47 = vsel %vm40, %v45, 0.0
    %v48 = vsel %vm40, %v46, 0.0
    %v49 = vadd.f32 %v47, %v48
    %v50 = vadd.f32 %v37, %v49
    %v51 = vld [vmem:[#allocation4 + $0x4] sm:$0xf]
    %v52 = vld [vmem:[#allocation4 + $0xc] sm:$0xf]
    %v53 = vsel %vm40, %v51, 0.0
    %v54 = vsel %vm40, %v52, 0.0
    %v55 = vadd.f32 %v53, %v54
    %v56 = vadd.f32 %v44, %v55
    %v57 = vmul.f32 %v51, %v51
    %v58 = vmul.f32 %v52, %v52
    %v59 = vsel %vm40, %v57, 0.0
    %v60 = vsel %vm40, %v58, 0.0
    %v61 = vadd.f32 %v59, %v60
    %v62 = vadd.f32 %v50, %v61
    %63 = vst [vmem:[#allocation2] sm:$0xf] %v56
    %64 = vst [vmem:[#allocation3] sm:$0xf] %v62
    // Predicated region
    $region22: #{tpu_custom_call.1} parent=1 // pred_check
      _
    $region23: #{tpu_custom_call.1} parent=1 // pred_check_branch
      %66 = sbr.rel (%p30) target = $region25
    $region24: #{tpu_custom_call.1} parent=1 // pred_region
      %v67 = vld [vmem:[#allocation2] sm:$0xf]
      %v68 = vsel %vm40, %v67, 0.0
      %69 = vadd.xlane.f32.xlu0 %v68
      %v70 = vpop.xlane.xlu0 %69
      %v71 = vld [vmem:[#allocation3] sm:$0xf]
      %v72 = vsel %vm40, %v71, 0.0
      %73 = vadd.xlane.f32.xlu0 %v72
      %v74 = vpop.xlane.xlu0 %73
      %v75 = vrcp.pop 512.0
      %v76 = vmul.f32 %v70, %v75
      %v77 = vmul.f32 %v76, 512.0
      %v78 = vmul.f32 %v77, %v76
      %v79 = vsub.f32 %v74, %v78
      %v80 = vrcp.pop 511.0
      %v81 = vmul.f32 %v79, %v80
      %v82 = vmax.f32 %v81, 0.0
      %v83 = vrsqrt.pop %v82
      %v84 = vmul.f32 %v82, %v83
      %vm85 = vcmp.eq.f32.partialorder %v82, inf
      %v86 = vsel %vm85, %v82, %v84
      %vm87 = vcmp.eq.f32.partialorder %v82, 0.0
      %v88 = vand.u32 %v82, 2147483648
      %v89 = vsel %vm87, %v88, %v86
      %v90 = vld [vmem:[%s1] sm:$0xf]
      %v91 = vadd.f32 %v89, 1e-06
      %v92 = vrcp.pop %v91
      %v93 = vmul.f32 %v90, %v92
      %v94 = vld [vmem:[%s2] sm:$0xf]
      %v95 = vmul.f32 %v76, %v93
      %v96 = vsub.f32 %v94, %v95
      %vm97 = vcmask 3072
      %98 = vst.msk [vmem:[%s3] sm:$0xf] %vm97, %v93
      %100 = vrot.lane.b32.xlu0 %v96, 1
      %v101 = vpop.permute.xlu0 %100
      %vm103 = vcmask 11272
      %104 = vst.msk [vmem:[%s3] sm:$0xf] %vm103, %v101
    $region25: #{tpu_custom_call.1} parent=1 // pred_fallthru
      _
    // Predicated region
    $region26: #{tpu_custom_call.1} parent=1 // pred_check
      _
    $region27: #{tpu_custom_call.1} parent=1 // pred_check_branch
      %106 = sbr.rel (0) target = $region29
    $region28: #{tpu_custom_call.1} parent=1 // pred_region
      _
    $region29: #{tpu_custom_call.1} parent=1 // pred_fallthru
      _
    // Predicated region
    $region30: #{tpu_custom_call.1} parent=1 // pred_check
      _
    $region31: #{tpu_custom_call.1} parent=1 // pred_check_branch
      %108 = sbr.rel (0) target = $region33
    $region32: #{tpu_custom_call.1} parent=1 // pred_region
      _
    $region33: #{tpu_custom_call.1} parent=1 // pred_fallthru
      _
    %109 = vsyncpa [#allocation5], 1

</llo_original>
